<compile_context>
chip_gen: v5e
topology: v5e:2x2
jax: 0.10.0
libtpu: 0.0.40
codegen_flags: <defaults>
</compile_context>

<pallas_src>
import functools
import math

import jax
import jax.numpy as jnp
from jax import lax
from jax.experimental import pallas as pl
from jax.experimental.pallas import tpu as pltpu

_BN_EPS = 1e-3                       # ultralytics Conv uses BatchNorm2d(eps=0.001)
_VMEM_BUDGET = 24 * 1024 * 1024      # conservative: fits v7x (64 MiB phys, 32 MiB default scoped)
_GROUP_ROWS_MAX_C1 = 128             # below this, group 3 column taps per kernel row (K = 3*C1)


# ----------------------------- Pallas kernel ------------------------------

def _max_sigmoid_attn_kernel(*refs, nh, hc, img_w, tile_h, inv_sqrt_hc,
                             has_ec, group_rows):
    # refs (has_ec=True):  ge, x, wec, bec, wp, bp, head_bias, head_scale, out
    # refs (has_ec=False): ge, x,            wp, bp, head_bias, head_scale, out
    if has_ec:
        (ge_ref, x_ref, wec_ref, bec_ref, wp_ref, bp_ref,
         bias_ref, scale_ref, o_ref) = refs
    else:
        ge_ref, x_ref, wp_ref, bp_ref, bias_ref, scale_ref, o_ref = refs

    r = pl.program_id(1)
    c1 = x_ref.shape[1]
    c2 = o_ref.shape[1]
    thw = tile_h * img_w                       # pixels in this output row tile
    win_len = (tile_h + 2) * img_w             # + one halo row above and below

    base = r * thw
    if thw % 128 == 0:
        base = pl.multiple_of(base, 128)
    # Row window of the resident padded image (image block has a constant index
    # over the row-tile axis, so it is DMA'd once per image).
    win = x_ref[0, :, pl.ds(base, win_len)]    # (C1, (tile_h+2)*W)

    # Column validity masks (W is not padded: out-of-row taps are zeroed).
    col = lax.broadcasted_iota(jnp.int32, (1, thw), 1) % img_w
    has_left = col != 0                        # reading column w-1 is valid
    has_right = col != (img_w - 1)             # reading column w+1 is valid

    def col_taps(slab):
        """(left, center, right) 3x3 column taps of one kernel row.
        Shifts are XLU lane rotates; wrapped lanes are masked to zero."""
        zero = jnp.zeros_like(slab)
        left = jnp.where(has_left, pltpu.roll(slab, shift=1, axis=1), zero)
        right = jnp.where(has_right,
                          pltpu.roll(slab, shift=(thw - 1) % thw, axis=1), zero)
        return left, slab, right

    # -------- per-head max-sigmoid gate (emb dies before the proj matmuls) --
    xi = win[:, img_w: img_w + thw]            # (C1, thw), the tile's own rows
    if has_ec:
        emb = jnp.dot(wec_ref[...], xi,
                      preferred_element_type=jnp.float32) + bec_ref[...]
    else:
        emb = xi.astype(jnp.float32)           # identity embed (c1 == ec)
    ge = ge_ref[0]                             # (N, EC) f32, Linear precomputed
    gates = []
    for m in range(nh):
        sc = jnp.dot(ge[:, m * hc:(m + 1) * hc], emb[m * hc:(m + 1) * hc, :],
                     preferred_element_type=jnp.float32)       # (N, thw)
        aw = jnp.max(sc, axis=0, keepdims=True)                # (1, thw)
        gates.append(jax.nn.sigmoid(aw * inv_sqrt_hc + bias_ref[m])
                     * scale_ref[m])
    gate = gates[0] if nh == 1 else jnp.concatenate(gates, axis=0)   # (nh, thw)
    # Expand once: row m*hc + c of the full gate is gate[m].
    gate_full = jnp.broadcast_to(gate[:, None, :],
                                 (nh, hc, thw)).reshape(c2, thw)     # (C2, thw)

    # -------- proj_conv: 3x3 conv + folded BN as accumulated matmuls --------
    acc = None
    for ki in range(3):
        slab = win[:, ki * img_w: ki * img_w + thw]    # rows h+ki-1, (C1, thw)
        left, center, right = col_taps(slab)
        if group_rows:
            # small C1: group the row's 3 taps so the MXU sees K = 3*C1
            row_patch = jnp.concatenate([left, center, right], axis=0)
            part = jnp.dot(wp_ref[:, ki * 3 * c1:(ki + 1) * 3 * c1], row_patch,
                           preferred_element_type=jnp.float32)
            acc = part if acc is None else acc + part
        else:
            # large C1: pure per-tap accumulation, zero copy traffic
            for kj, tap in enumerate((left, center, right)):
                t = ki * 3 + kj
                part = jnp.dot(wp_ref[:, t * c1:(t + 1) * c1], tap,
                               preferred_element_type=jnp.float32)
                acc = part if acc is None else acc + part
    proj = acc + bp_ref[...]                                   # (C2, thw) f32

    # One multiply, one full-tile lane-dense store (already NCHW layout).
    o_ref[0] = (proj * gate_full).astype(o_ref.dtype)


# ----------------------------- host-side glue -----------------------------

def _estimate_vmem_bytes(*, c1, c2, ec, n_txt, h, w, tile_h, itemsize,
                         has_ec, group_rows):
    """Rough per-tile VMEM residency model (double-buffered pipeline blocks)."""
    thw = tile_h * w
    b = 0
    b += c1 * (h + 2) * w * itemsize * 2                   # resident padded image
    b += c2 * 9 * c1 * itemsize * 2                         # proj weights
    if has_ec:
        b += ec * c1 * itemsize * 2                         # ec conv weights
    b += (n_txt * ec + ec + c2) * 4 * 2                     # ge block + biases
    b += c1 * (tile_h + 2) * w * itemsize                   # `win` slice
    b += (3 if group_rows else 2) * c1 * thw * itemsize     # transient taps
    b += (2 * c2 + ec) * thw * 4                            # proj + gate + emb f32
    b += c2 * thw * 4 * 2                                   # output block
    return b


def _pick_tile_h(h, w, *, vmem_budget, est_fn):
    """Largest row-tile height dividing h, 128-pixel aligned (or full image),
    that fits the VMEM budget; smallest valid tiling otherwise."""
    smallest_valid = h
    for th in range(h, 0, -1):
        if h % th:
            continue
        if th != h and (th * w) % 128:
            continue
        smallest_valid = th
        if est_fn(th) <= vmem_budget:
            return th
    return smallest_valid


def _fold_bn(w_oihw, bn):
    gamma, beta, mean, var = bn
    s = gamma / jnp.sqrt(var + _BN_EPS)
    return w_oihw * s[:, None, None, None], beta - mean * s


def prepare_params(raw):
    """Fold BN into the convs and lay weights out for the kernel (done ONCE)."""
    out = {
        "wgl_t": raw["gl_w"].T,                         # (GC, EC)
        "bgl": raw["gl_b"].reshape(1, -1),              # (1, EC)
        "head_bias": raw["head_bias"],                  # (NH,)
        "head_scale": raw["head_scale"],                # (NH,)
    }
    if "ec_w" in raw:                                   # c1 != ec: 1x1 conv present
        w, b = _fold_bn(raw["ec_w"], raw["ec_bn"])
        out["wec"] = w[:, :, 0, 0]                      # (EC, C1)
        out["bec"] = b.reshape(-1, 1)                   # (EC, 1)
    w, b = _fold_bn(raw["proj_w"], raw["proj_bn"])
    c2, c1 = w.shape[0], w.shape[1]
    # (C2, C1, 3, 3) -> (C2, 9*C1) with column order (ki*3+kj)*C1 + cin.
    out["wp"] = jnp.transpose(w, (0, 2, 3, 1)).reshape(c2, 9 * c1)
    out["bp"] = b.reshape(-1, 1)                        # (C2, 1)
    return out


def max_sigmoid_attn_forward(x_nchw, guide, params, *, nh, tile_h=None,
                             mxu_dtype=jnp.bfloat16, out_dtype=jnp.float32,
                             vmem_budget_bytes=_VMEM_BUDGET):
    """MaxSigmoidAttnBlock.forward(x, guide) -> (bs, c2, h, w) in NCHW."""
    bs, c1, h, w = x_nchw.shape
    n_txt = guide.shape[1]
    ec = params["wgl_t"].shape[1]
    c2 = params["wp"].shape[0]
    has_ec = "wec" in params
    assert c2 % nh == 0, "c2 must be divisible by nh"
    hc = c2 // nh
    assert ec == nh * hc == c2, "module requires embed channels == nh*hc == c2"
    if not has_ec:
        assert c1 == ec, "c1 must equal ec when the 1x1 ec conv is absent"
    assert hc % 8 == 0, "head channel count must be sublane-aligned (mult of 8)"
    # TODO(synk): general (sublane-unaligned hc) path via per-head masked stores.

    itemsize = jnp.dtype(mxu_dtype).itemsize
    group_rows = c1 < _GROUP_ROWS_MAX_C1
    est = functools.partial(_estimate_vmem_bytes, c1=c1, c2=c2, ec=ec,
                            n_txt=n_txt, h=h, w=w, itemsize=itemsize,
                            has_ec=has_ec, group_rows=group_rows)
    if tile_h is None:
        tile_h = _pick_tile_h(h, w, vmem_budget=vmem_budget_bytes,
                              est_fn=lambda th: est(tile_h=th))
    assert h % tile_h == 0, "tile_h must divide H"
    n_rows = h // tile_h
    assert n_rows == 1 or (tile_h * w) % 128 == 0, \
        "row tiles must be 128-pixel aligned (or use a single tile)"

    # Guide Linear hoisted out of the per-tile kernel body: done once per image
    # instead of once per row tile; drops wgl/bgl from kernel VMEM.
    ge = (jnp.einsum("bng,ge->bne", guide.astype(jnp.float32), params["wgl_t"],
                     precision=lax.Precision.HIGHEST)
          + params["bgl"]).astype(jnp.float32)

    # Zero-pad H by 1 (3x3 halo rows) and flatten spatially; channels-first so
    # the pixel axis lands on TPU lanes (lane-dense output, already NCHW).
    xp = jnp.pad(x_nchw, ((0, 0), (0, 0), (1, 1), (0, 0)))
    xp = xp.reshape(bs, c1, (h + 2) * w).astype(mxu_dtype)

    wp = params["wp"].astype(mxu_dtype)
    bp = params["bp"].astype(jnp.float32)
    head_bias = params["head_bias"].astype(jnp.float32)
    head_scale = params["head_scale"].astype(jnp.float32)

    in_specs = [
        pl.BlockSpec((1, n_txt, ec), lambda b, r: (b, 0, 0)),        # ge
        pl.BlockSpec((1, c1, (h + 2) * w), lambda b, r: (b, 0, 0)),  # x (padded)
    ]
    args = [ge, xp]
    if has_ec:
        wec = params["wec"].astype(mxu_dtype)
        bec = params["bec"].astype(jnp.float32)
        in_specs += [pl.BlockSpec((ec, c1), lambda b, r: (0, 0)),    # ec conv W
                     pl.BlockSpec((ec, 1), lambda b, r: (0, 0))]     # ec bias
        args += [wec, bec]
    in_specs += [
        pl.BlockSpec((c2, 9 * c1), lambda b, r: (0, 0)),             # proj conv W
        pl.BlockSpec((c2, 1), lambda b, r: (0, 0)),                  # proj bias
        pl.BlockSpec(memory_space=pltpu.MemorySpace.SMEM),           # head bias
        pl.BlockSpec(memory_space=pltpu.MemorySpace.SMEM),           # head scale
    ]
    args += [wp, bp, head_bias, head_scale]

    kernel = functools.partial(
        _max_sigmoid_attn_kernel, nh=nh, hc=hc, img_w=w, tile_h=tile_h,
        inv_sqrt_hc=1.0 / math.sqrt(hc), has_ec=has_ec, group_rows=group_rows)

    hw = h * w
    cost = pl.CostEstimate(
        flops=int(2 * bs * hw * (9 * c1 * c2
                                 + (c1 * ec if has_ec else 0)
                                 + n_txt * ec)),
        transcendentals=int(bs * nh * hw),
        bytes_accessed=int(xp.size * itemsize + ge.size * 4
                           + bs * c2 * hw * jnp.dtype(out_dtype).itemsize
                           + sum(int(a.size) * a.dtype.itemsize
                                 for a in args[2:])))

    vmem_limit = int(min(48 * 2**20, max(32 * 2**20, 3 * est(tile_h=tile_h) // 2)))

    out = pl.pallas_call(
        kernel,
        out_shape=jax.ShapeDtypeStruct((bs, c2, hw), out_dtype),
        grid=(bs, n_rows),
        in_specs=in_specs,
        out_specs=pl.BlockSpec((1, c2, tile_h * w), lambda b, r: (b, 0, r)),
        compiler_params=pltpu.CompilerParams(
            # Row tiles are fully independent -> both axes parallel (v7x 2 TCs).
            dimension_semantics=("parallel", "parallel"),
            vmem_limit_bytes=vmem_limit),
        cost_estimate=cost,
    )(*args)

    return out.reshape(bs, c2, h, w)


# ----------------------------- pure-JAX reference --------------------------

def _bn_apply(y, bn):
    gamma, beta, mean, var = bn
    s = gamma / jnp.sqrt(var + _BN_EPS)
    return (y - mean[None, :, None, None]) * s[None, :, None, None] \
        + beta[None, :, None, None]


def ref_forward(x, guide, raw, nh):
    bs, c1, h, w = x.shape
    c2 = raw["proj_w"].shape[0]
    hc = c2 // nh
    g = jnp.einsum("bng,eg->bne", guide, raw["gl_w"],
                   precision=lax.Precision.HIGHEST) + raw["gl_b"]
    g = g.reshape(bs, -1, nh, hc)
    if "ec_w" in raw:
        e = lax.conv_general_dilated(
            x, raw["ec_w"], (1, 1), "SAME",
            dimension_numbers=("NCHW", "OIHW", "NCHW"),
            precision=lax.Precision.HIGHEST)
        e = _bn_apply(e, raw["ec_bn"])
    else:
        e = x
    embed = e.reshape(bs, nh, hc, h, w)
    aw = jnp.einsum("bmchw,bnmc->bmhwn", embed, g,
                    precision=lax.Precision.HIGHEST)
    aw = aw.max(axis=-1) / (hc ** 0.5) + raw["head_bias"][None, :, None, None]
    aw = jax.nn.sigmoid(aw) * raw["head_scale"][None, :, None, None]
    xp = lax.conv_general_dilated(
        x, raw["proj_w"], (1, 1), "SAME",
        dimension_numbers=("NCHW", "OIHW", "NCHW"),
        precision=lax.Precision.HIGHEST)
    xp = _bn_apply(xp, raw["proj_bn"])
    xp = xp.reshape(bs, nh, hc, h, w) * aw[:, :, None]
    return xp.reshape(bs, c2, h, w)


# ----------------------------- demo / self-check ---------------------------

def init_raw_params(key, c1, c2, ec, gc, nh, scale=False):
    ks = jax.random.split(key, 12)

    def bn(kg, kb, km, kv, c):
        return (jax.random.uniform(kg, (c,), minval=0.5, maxval=1.5),
                jax.random.normal(kb, (c,)) * 0.1,
                jax.random.normal(km, (c,)) * 0.1,
                jax.random.uniform(kv, (c,), minval=0.5, maxval=1.5))

    raw = {
        "gl_w": jax.random.normal(ks[0], (ec, gc)) * 0.1,
        "gl_b": jax.random.normal(ks[1], (ec,)) * 0.1,
        "head_bias": jax.random.normal(ks[2], (nh,)) * 0.1,
        "head_scale": (jax.random.uniform(ks[3], (nh,), minval=0.5, maxval=1.5)
                       if scale else jnp.ones((nh,), jnp.float32)),
        "proj_w": jax.random.normal(ks[4], (c2, c1, 3, 3)) * 0.1,
        "proj_bn": bn(ks[5], ks[6], ks[7], ks[8], c2),
    }
    if c1 != ec:
        raw["ec_w"] = jax.random.normal(ks[9], (ec, c1, 1, 1)) * 0.1
        raw["ec_bn"] = bn(*jax.random.split(ks[10], 4), ec)
    return raw


if __name__ == "__main__":
    key = jax.random.PRNGKey(0)

    # ---- config 1: c1 != ec -> 1x1 ec conv path, two row tiles -------------
    bs, c1, c2, nh = 2, 16, 32, 2
    ec, gc, n_txt, H, W = 32, 32, 8, 16, 16
    k_x, k_g, k_p, k2 = jax.random.split(key, 4)
    x = jax.random.normal(k_x, (bs, c1, H, W), jnp.float32)
    guide = jax.random.normal(k_g, (bs, n_txt, gc), jnp.float32)
    raw = init_raw_params(k_p, c1, c2, ec, gc, nh, scale=False)
    params = prepare_params(raw)          # BN folding hoisted (done once)
    ref = ref_forward(x, guide, raw, nh)

    # f32 MXU path
    out = max_sigmoid_attn_forward(x, guide, params, nh=nh, tile_h=8,
                                   mxu_dtype=jnp.float32)
    out = jax.block_until_ready(out)
    assert out.shape == (bs, c2, H, W)
    err = jnp.max(jnp.abs(out - ref))
    assert jnp.allclose(out, ref, atol=1e-2, rtol=1e-2), \
        f"f32 kernel mismatch vs reference, max abs err = {err}"

    # bf16 MXU inputs + bf16 output, f32 accumulation (v5e/v6e/v7x setting)
    out_bf16 = max_sigmoid_attn_forward(x, guide, params, nh=nh, tile_h=8,
                                        mxu_dtype=jnp.bfloat16,
                                        out_dtype=jnp.bfloat16)
    out_bf16 = jax.block_until_ready(out_bf16).astype(jnp.float32)
    err = jnp.max(jnp.abs(out_bf16 - ref))
    assert jnp.allclose(out_bf16, ref, atol=1e-1, rtol=1e-1), \
        f"bf16 kernel mismatch vs reference, max abs err = {err}"

    # ---- config 2: c1 == ec == c2 -> identity embed path, learned scale ----
    c1b = 32
    k_x2, k_g2, k_p2 = jax.random.split(k2, 3)
    x2 = jax.random.normal(k_x2, (bs, c1b, H, W), jnp.float32)
    guide2 = jax.random.normal(k_g2, (bs, n_txt, gc), jnp.float32)
    raw2 = init_raw_params(k_p2, c1b, c2, ec, gc, nh, scale=True)
    params2 = prepare_params(raw2)
    ref2 = ref_forward(x2, guide2, raw2, nh)
    out2 = max_sigmoid_attn_forward(x2, guide2, params2, nh=nh,
                                    mxu_dtype=jnp.float32)
    out2 = jax.block_until_ready(out2)
    err = jnp.max(jnp.abs(out2 - ref2))
    assert jnp.allclose(out2, ref2, atol=1e-2, rtol=1e-2), \
        f"identity-path kernel mismatch vs reference, max abs err = {err}"

    print("KERNEL_OK")
</pallas_src>

<mosaic_0001>
module attributes {stable_mosaic.version = 11 : i64} {
  func.func @_max_sigmoid_attn_kernel(%arg0: i32, %arg1: i32, %arg2: memref<1x8x32xf32, #tpu.memory_space<vmem>>, %arg3: memref<1x16x288xf32, #tpu.memory_space<vmem>>, %arg4: memref<32x16xf32, #tpu.memory_space<vmem>>, %arg5: memref<32x1xf32, #tpu.memory_space<vmem>>, %arg6: memref<32x144xf32, #tpu.memory_space<vmem>>, %arg7: memref<32x1xf32, #tpu.memory_space<vmem>>, %arg8: memref<2xf32, #tpu.memory_space<smem>>, %arg9: memref<2xf32, #tpu.memory_space<smem>>, %arg10: memref<1x32x128xf32, #tpu.memory_space<vmem>>) attributes {dimension_semantics = [#tpu.dimension_semantics<parallel>, #tpu.dimension_semantics<parallel>], iteration_bounds = array<i64: 2, 2>, scalar_prefetch = 0 : i64, scratch_operands = 0 : i64, tpu.core_type = #tpu.core_type<tc>, window_params = [{transform_indices = @transform_0, window_bounds = array<i64: 1, 8, 32>}, {transform_indices = @transform_1, window_bounds = array<i64: 1, 16, 288>}, {pipeline_mode = #tpu.pipeline_mode<synchronous>, transform_indices = @transform_2, window_bounds = array<i64: 32, 16>}, {pipeline_mode = #tpu.pipeline_mode<synchronous>, transform_indices = @transform_3, window_bounds = array<i64: 32, 1>}, {pipeline_mode = #tpu.pipeline_mode<synchronous>, transform_indices = @transform_4, window_bounds = array<i64: 32, 144>}, {pipeline_mode = #tpu.pipeline_mode<synchronous>, transform_indices = @transform_5, window_bounds = array<i64: 32, 1>}, {transform_indices = @transform_6, window_bounds = array<i64: 2>}, {transform_indices = @transform_7, window_bounds = array<i64: 2>}, {transform_indices = @transform_8, window_bounds = array<i64: 1, 32, 128>}]} {
    %c128_i32 = arith.constant 128 : i32
    %0 = arith.muli %arg1, %c128_i32 : i32
    %1 = tpu.assume_multiple %0, 128 : i32
    %c0 = arith.constant 0 : index
    %c0_0 = arith.constant 0 : index
    %2 = arith.index_cast %1 : i32 to index
    %3 = vector.load %arg3[%c0, %c0_0, %2] : memref<1x16x288xf32, #tpu.memory_space<vmem>>, vector<1x16x160xf32>
    %4 = vector.shape_cast %3 : vector<1x16x160xf32> to vector<16x160xf32>
    %5 = tpu.iota {dimensions = array<i32: 1>} : vector<1x128xi32>
    %c16_i32 = arith.constant 16 : i32
    %c0_i32 = arith.constant 0 : i32
    %6 = arith.cmpi eq, %c16_i32, %c0_i32 : i32
    %c1_i32 = arith.constant 1 : i32
    %7 = arith.select %6, %c1_i32, %c16_i32 : i32
    %8 = vector.broadcast %7 : i32 to vector<1x128xi32>
    %9 = arith.remsi %5, %8 : vector<1x128xi32>
    %c0_i32_1 = arith.constant 0 : i32
    %10 = vector.broadcast %c0_i32_1 : i32 to vector<1x128xi32>
    %11 = arith.cmpi ne, %9, %10 : vector<1x128xi32>
    %c0_i32_2 = arith.constant 0 : i32
    %12 = vector.broadcast %c0_i32_2 : i32 to vector<1x128xi32>
    %13 = arith.cmpi slt, %9, %12 : vector<1x128xi32>
    %c0_i32_3 = arith.constant 0 : i32
    %14 = arith.cmpi slt, %7, %c0_i32_3 : i32
    %15 = vector.broadcast %14 : i1 to vector<1x128xi1>
    %16 = vector.broadcast %15 : vector<1x128xi1> to vector<1x128xi1>
    %17 = arith.xori %13, %16 : vector<1x128xi1>
    %18 = arith.andi %17, %11 : vector<1x128xi1>
    %19 = vector.broadcast %7 : i32 to vector<1x128xi32>
    %20 = arith.addi %9, %19 : vector<1x128xi32>
    %21 = arith.select %18, %20, %9 : vector<1x128xi1>, vector<1x128xi32>
    %c0_i32_4 = arith.constant 0 : i32
    %22 = vector.broadcast %c0_i32_4 : i32 to vector<1x128xi32>
    %23 = arith.cmpi ne, %21, %22 : vector<1x128xi32>
    %c15_i32 = arith.constant 15 : i32
    %24 = vector.broadcast %c15_i32 : i32 to vector<1x128xi32>
    %25 = arith.cmpi ne, %21, %24 : vector<1x128xi32>
    %26 = vector.extract_strided_slice %4 {offsets = [0, 16], sizes = [16, 128], strides = [1, 1]} : vector<16x160xf32> to vector<16x128xf32>
    %c0_5 = arith.constant 0 : index
    %c0_6 = arith.constant 0 : index
    %27 = vector.load %arg4[%c0_5, %c0_6] : memref<32x16xf32, #tpu.memory_space<vmem>>, vector<32x16xf32>
    %cst = arith.constant dense<0.000000e+00> : vector<32x128xf32>
    %28 = tpu.matmul %27, %26, %cst {dimension_numbers = #tpu.dot_dimension_numbers<[1], [0], [0], [1], [0, 0, 1, 1], [], []>} : vector<32x16xf32>, vector<16x128xf32>, vector<32x128xf32> -> vector<32x128xf32>
    %c0_7 = arith.constant 0 : index
    %c0_8 = arith.constant 0 : index
    %29 = vector.load %arg5[%c0_7, %c0_8] : memref<32x1xf32, #tpu.memory_space<vmem>>, vector<32x1xf32>
    %30 = vector.broadcast %29 : vector<32x1xf32> to vector<32x128xf32>
    %31 = arith.addf %28, %30 : vector<32x128xf32>
    %c0_9 = arith.constant 0 : index
    %c0_10 = arith.constant 0 : index
    %c0_11 = arith.constant 0 : index
    %32 = vector.load %arg2[%c0_9, %c0_10, %c0_11] : memref<1x8x32xf32, #tpu.memory_space<vmem>>, vector<1x8x32xf32>
    %33 = vector.shape_cast %32 : vector<1x8x32xf32> to vector<8x32xf32>
    %34 = vector.extract_strided_slice %33 {offsets = [0, 0], sizes = [8, 16], strides = [1, 1]} : vector<8x32xf32> to vector<8x16xf32>
    %35 = vector.extract_strided_slice %31 {offsets = [0, 0], sizes = [16, 128], strides = [1, 1]} : vector<32x128xf32> to vector<16x128xf32>
    %cst_12 = arith.constant dense<0.000000e+00> : vector<8x128xf32>
    %36 = tpu.matmul %34, %35, %cst_12 {dimension_numbers = #tpu.dot_dimension_numbers<[1], [0], [0], [1], [0, 0, 1, 1], [], []>} : vector<8x16xf32>, vector<16x128xf32>, vector<8x128xf32> -> vector<8x128xf32>
    %cst_13 = arith.constant dense<0xFF800000> : vector<128xf32>
    %37 = vector.multi_reduction <maximumf>, %36, %cst_13 [0] : vector<8x128xf32> to vector<128xf32>
    %38 = vector.shape_cast %37 : vector<128xf32> to vector<1x128xf32>
    %cst_14 = arith.constant 2.500000e-01 : f32
    %39 = vector.broadcast %cst_14 : f32 to vector<1x128xf32>
    %40 = arith.mulf %38, %39 : vector<1x128xf32>
    %c0_15 = arith.constant 0 : index
    %41 = memref.load %arg8[%c0_15] : memref<2xf32, #tpu.memory_space<smem>>
    %42 = vector.broadcast %41 : f32 to vector<1x128xf32>
    %43 = arith.addf %40, %42 : vector<1x128xf32>
    %44 = arith.negf %43 : vector<1x128xf32>
    %45 = math.exp %44 : vector<1x128xf32>
    %cst_16 = arith.constant 1.000000e+00 : f32
    %46 = vector.broadcast %cst_16 : f32 to vector<1x128xf32>
    %47 = arith.addf %46, %45 : vector<1x128xf32>
    %48 = arith.divf %46, %47 : vector<1x128xf32>
    %c0_17 = arith.constant 0 : index
    %49 = memref.load %arg9[%c0_17] : memref<2xf32, #tpu.memory_space<smem>>
    %50 = vector.broadcast %49 : f32 to vector<1x128xf32>
    %51 = arith.mulf %48, %50 : vector<1x128xf32>
    %52 = vector.extract_strided_slice %33 {offsets = [0, 16], sizes = [8, 16], strides = [1, 1]} : vector<8x32xf32> to vector<8x16xf32>
    %53 = vector.extract_strided_slice %31 {offsets = [16, 0], sizes = [16, 128], strides = [1, 1]} : vector<32x128xf32> to vector<16x128xf32>
    %cst_18 = arith.constant dense<0.000000e+00> : vector<8x128xf32>
    %54 = tpu.matmul %52, %53, %cst_18 {dimension_numbers = #tpu.dot_dimension_numbers<[1], [0], [0], [1], [0, 0, 1, 1], [], []>} : vector<8x16xf32>, vector<16x128xf32>, vector<8x128xf32> -> vector<8x128xf32>
    %cst_19 = arith.constant dense<0xFF800000> : vector<128xf32>
    %55 = vector.multi_reduction <maximumf>, %54, %cst_19 [0] : vector<8x128xf32> to vector<128xf32>
    %56 = vector.shape_cast %55 : vector<128xf32> to vector<1x128xf32>
    %cst_20 = arith.constant 2.500000e-01 : f32
    %57 = vector.broadcast %cst_20 : f32 to vector<1x128xf32>
    %58 = arith.mulf %56, %57 : vector<1x128xf32>
    %c1 = arith.constant 1 : index
    %59 = memref.load %arg8[%c1] : memref<2xf32, #tpu.memory_space<smem>>
    %60 = vector.broadcast %59 : f32 to vector<1x128xf32>
    %61 = arith.addf %58, %60 : vector<1x128xf32>
    %62 = arith.negf %61 : vector<1x128xf32>
    %63 = math.exp %62 : vector<1x128xf32>
    %cst_21 = arith.constant 1.000000e+00 : f32
    %64 = vector.broadcast %cst_21 : f32 to vector<1x128xf32>
    %65 = arith.addf %64, %63 : vector<1x128xf32>
    %66 = arith.divf %64, %65 : vector<1x128xf32>
    %c1_22 = arith.constant 1 : index
    %67 = memref.load %arg9[%c1_22] : memref<2xf32, #tpu.memory_space<smem>>
    %68 = vector.broadcast %67 : f32 to vector<1x128xf32>
    %69 = arith.mulf %66, %68 : vector<1x128xf32>
    %70 = tpu.concatenate %51, %69 in 0 : vector<1x128xf32>, vector<1x128xf32> -> vector<2x128xf32>
    %71 = vector.shape_cast %70 : vector<2x128xf32> to vector<2x1x128xf32>
    %72 = vector.shape_cast %71 : vector<2x1x128xf32> to vector<2x1x128xf32>
    %73 = vector.broadcast %72 : vector<2x1x128xf32> to vector<2x16x128xf32>
    %74 = vector.shape_cast %73 : vector<2x16x128xf32> to vector<32x128xf32>
    %75 = vector.extract_strided_slice %4 {offsets = [0, 0], sizes = [16, 128], strides = [1, 1]} : vector<16x160xf32> to vector<16x128xf32>
    %cst_23 = arith.constant 0.000000e+00 : f32
    %76 = vector.broadcast %cst_23 : f32 to vector<16x128xf32>
    %c1_i32_24 = arith.constant 1 : i32
    %77 = tpu.dynamic_rotate %75 by %c1_i32_24 dim 1 : vector<16x128xf32>, i32 -> vector<16x128xf32>
    %78 = vector.shape_cast %23 : vector<1x128xi1> to vector<1x128xi1>
    %79 = vector.broadcast %78 : vector<1x128xi1> to vector<16x128xi1>
    %80 = arith.select %79, %77, %76 : vector<16x128xi1>, vector<16x128xf32>
    %c127_i32 = arith.constant 127 : i32
    %81 = tpu.dynamic_rotate %75 by %c127_i32 dim 1 : vector<16x128xf32>, i32 -> vector<16x128xf32>
    %82 = vector.shape_cast %25 : vector<1x128xi1> to vector<1x128xi1>
    %83 = vector.broadcast %82 : vector<1x128xi1> to vector<16x128xi1>
    %84 = arith.select %83, %81, %76 : vector<16x128xi1>, vector<16x128xf32>
    %85 = tpu.concatenate %80, %75, %84 in 0 : vector<16x128xf32>, vector<16x128xf32>, vector<16x128xf32> -> vector<48x128xf32>
    %c0_25 = arith.constant 0 : index
    %c0_26 = arith.constant 0 : index
    %86 = vector.load %arg6[%c0_25, %c0_26] : memref<32x144xf32, #tpu.memory_space<vmem>>, vector<32x48xf32>
    %cst_27 = arith.constant dense<0.000000e+00> : vector<32x128xf32>
    %87 = tpu.matmul %86, %85, %cst_27 {dimension_numbers = #tpu.dot_dimension_numbers<[1], [0], [0], [1], [0, 0, 1, 1], [], []>} : vector<32x48xf32>, vector<48x128xf32>, vector<32x128xf32> -> vector<32x128xf32>
    %88 = vector.extract_strided_slice %4 {offsets = [0, 16], sizes = [16, 128], strides = [1, 1]} : vector<16x160xf32> to vector<16x128xf32>
    %cst_28 = arith.constant 0.000000e+00 : f32
    %89 = vector.broadcast %cst_28 : f32 to vector<16x128xf32>
    %c1_i32_29 = arith.constant 1 : i32
    %90 = tpu.dynamic_rotate %88 by %c1_i32_29 dim 1 : vector<16x128xf32>, i32 -> vector<16x128xf32>
    %91 = vector.shape_cast %23 : vector<1x128xi1> to vector<1x128xi1>
    %92 = vector.broadcast %91 : vector<1x128xi1> to vector<16x128xi1>
    %93 = arith.select %92, %90, %89 : vector<16x128xi1>, vector<16x128xf32>
    %c127_i32_30 = arith.constant 127 : i32
    %94 = tpu.dynamic_rotate %88 by %c127_i32_30 dim 1 : vector<16x128xf32>, i32 -> vector<16x128xf32>
    %95 = vector.shape_cast %25 : vector<1x128xi1> to vector<1x128xi1>
    %96 = vector.broadcast %95 : vector<1x128xi1> to vector<16x128xi1>
    %97 = arith.select %96, %94, %89 : vector<16x128xi1>, vector<16x128xf32>
    %98 = tpu.concatenate %93, %88, %97 in 0 : vector<16x128xf32>, vector<16x128xf32>, vector<16x128xf32> -> vector<48x128xf32>
    %c0_31 = arith.constant 0 : index
    %c48 = arith.constant 48 : index
    %99 = vector.load %arg6[%c0_31, %c48] : memref<32x144xf32, #tpu.memory_space<vmem>>, vector<32x48xf32>
    %cst_32 = arith.constant dense<0.000000e+00> : vector<32x128xf32>
    %100 = tpu.matmul %99, %98, %cst_32 {dimension_numbers = #tpu.dot_dimension_numbers<[1], [0], [0], [1], [0, 0, 1, 1], [], []>} : vector<32x48xf32>, vector<48x128xf32>, vector<32x128xf32> -> vector<32x128xf32>
    %101 = arith.addf %87, %100 : vector<32x128xf32>
    %102 = vector.extract_strided_slice %4 {offsets = [0, 32], sizes = [16, 128], strides = [1, 1]} : vector<16x160xf32> to vector<16x128xf32>
    %cst_33 = arith.constant 0.000000e+00 : f32
    %103 = vector.broadcast %cst_33 : f32 to vector<16x128xf32>
    %c1_i32_34 = arith.constant 1 : i32
    %104 = tpu.dynamic_rotate %102 by %c1_i32_34 dim 1 : vector<16x128xf32>, i32 -> vector<16x128xf32>
    %105 = vector.shape_cast %23 : vector<1x128xi1> to vector<1x128xi1>
    %106 = vector.broadcast %105 : vector<1x128xi1> to vector<16x128xi1>
    %107 = arith.select %106, %104, %103 : vector<16x128xi1>, vector<16x128xf32>
    %c127_i32_35 = arith.constant 127 : i32
    %108 = tpu.dynamic_rotate %102 by %c127_i32_35 dim 1 : vector<16x128xf32>, i32 -> vector<16x128xf32>
    %109 = vector.shape_cast %25 : vector<1x128xi1> to vector<1x128xi1>
    %110 = vector.broadcast %109 : vector<1x128xi1> to vector<16x128xi1>
    %111 = arith.select %110, %108, %103 : vector<16x128xi1>, vector<16x128xf32>
    %112 = tpu.concatenate %107, %102, %111 in 0 : vector<16x128xf32>, vector<16x128xf32>, vector<16x128xf32> -> vector<48x128xf32>
    %c0_36 = arith.constant 0 : index
    %c96 = arith.constant 96 : index
    %113 = vector.load %arg6[%c0_36, %c96] : memref<32x144xf32, #tpu.memory_space<vmem>>, vector<32x48xf32>
    %cst_37 = arith.constant dense<0.000000e+00> : vector<32x128xf32>
    %114 = tpu.matmul %113, %112, %cst_37 {dimension_numbers = #tpu.dot_dimension_numbers<[1], [0], [0], [1], [0, 0, 1, 1], [], []>} : vector<32x48xf32>, vector<48x128xf32>, vector<32x128xf32> -> vector<32x128xf32>
    %115 = arith.addf %101, %114 : vector<32x128xf32>
    %c0_38 = arith.constant 0 : index
    %c0_39 = arith.constant 0 : index
    %116 = vector.load %arg7[%c0_38, %c0_39] : memref<32x1xf32, #tpu.memory_space<vmem>>, vector<32x1xf32>
    %117 = vector.broadcast %116 : vector<32x1xf32> to vector<32x128xf32>
    %118 = arith.addf %115, %117 : vector<32x128xf32>
    %119 = arith.mulf %118, %74 : vector<32x128xf32>
    %c0_40 = arith.constant 0 : index
    %c0_41 = arith.constant 0 : index
    %c0_42 = arith.constant 0 : index
    %120 = vector.load %arg10[%c0_40, %c0_41, %c0_42] : memref<1x32x128xf32, #tpu.memory_space<vmem>>, vector<1x32x128xf32>
    %121 = vector.shape_cast %120 : vector<1x32x128xf32> to vector<32x128xf32>
    %122 = vector.shape_cast %119 : vector<32x128xf32> to vector<1x32x128xf32>
    tpu.vector_store %arg10[%c0_40, %c0_41, %c0_42], %122 {strides = array<i32>} : memref<1x32x128xf32, #tpu.memory_space<vmem>>, vector<1x32x128xf32>,
    return
  }
  func.func @transform_0(%arg0: i32, %arg1: i32) -> (i32, i32, i32) {
    %c0_i32 = arith.constant 0 : i32
    %c0_i32_0 = arith.constant 0 : i32
    %c0_i32_1 = arith.constant 0 : i32
    return %arg0, %c0_i32, %c0_i32_0 : i32, i32, i32
  }
  func.func @transform_1(%arg0: i32, %arg1: i32) -> (i32, i32, i32) {
    %c0_i32 = arith.constant 0 : i32
    %c0_i32_0 = arith.constant 0 : i32
    %c0_i32_1 = arith.constant 0 : i32
    return %arg0, %c0_i32, %c0_i32_0 : i32, i32, i32
  }
  func.func @transform_2(%arg0: i32, %arg1: i32) -> (i32, i32) {
    %c0_i32 = arith.constant 0 : i32
    %c0_i32_0 = arith.constant 0 : i32
    %c0_i32_1 = arith.constant 0 : i32
    return %c0_i32, %c0_i32_0 : i32, i32
  }
  func.func @transform_3(%arg0: i32, %arg1: i32) -> (i32, i32) {
    %c0_i32 = arith.constant 0 : i32
    %c0_i32_0 = arith.constant 0 : i32
    %c0_i32_1 = arith.constant 0 : i32
    return %c0_i32, %c0_i32_0 : i32, i32
  }
  func.func @transform_4(%arg0: i32, %arg1: i32) -> (i32, i32) {
    %c0_i32 = arith.constant 0 : i32
    %c0_i32_0 = arith.constant 0 : i32
    %c0_i32_1 = arith.constant 0 : i32
    return %c0_i32, %c0_i32_0 : i32, i32
  }
  func.func @transform_5(%arg0: i32, %arg1: i32) -> (i32, i32) {
    %c0_i32 = arith.constant 0 : i32
    %c0_i32_0 = arith.constant 0 : i32
    %c0_i32_1 = arith.constant 0 : i32
    return %c0_i32, %c0_i32_0 : i32, i32
  }
  func.func @transform_6(%arg0: i32, %arg1: i32) -> i32 {
    %c0_i32 = arith.constant 0 : i32
    %c0_i32_0 = arith.constant 0 : i32
    return %c0_i32 : i32
  }
  func.func @transform_7(%arg0: i32, %arg1: i32) -> i32 {
    %c0_i32 = arith.constant 0 : i32
    %c0_i32_0 = arith.constant 0 : i32
    return %c0_i32 : i32
  }
  func.func @transform_8(%arg0: i32, %arg1: i32) -> (i32, i32, i32) {
    %c0_i32 = arith.constant 0 : i32
    %c0_i32_0 = arith.constant 0 : i32
    return %arg0, %c0_i32, %arg1 : i32, i32, i32
  }
}

</mosaic_0001>

<llo_original>
// kernel: tpu_custom_call.1
$region0: #{tpu_custom_call.1}
  #allocation0 [shape = 'u32[]', space=smem, size = 0x4, offset = 0x4, fixed_abs, tag = 'smem constant byte address 0x4 - core index']
  #allocation1 [shape = 'u32[72,128]{1,0:T(1,128)}', space=vmem, size = 0x9000, scoped, tag = 'internal scratch']
  %s0 = inlined_call_operand.vmem [shape: f32[2,8,32], index: 0, kind: input, shape index: {}]
  %s1 = inlined_call_operand.vmem [shape: f32[2,16,288], index: 1, kind: input, shape index: {}]
  %s2 = inlined_call_operand.vmem [shape: f32[32,16], index: 2, kind: input, shape index: {}]
  %s3 = inlined_call_operand.vmem [shape: f32[32,1], index: 3, kind: input, shape index: {}]
  %s4 = inlined_call_operand.hbm [shape: f32[32,144], index: 4, kind: input, shape index: {}]
  %s5 = inlined_call_operand.vmem [shape: f32[32,1], index: 5, kind: input, shape index: {}]
  %s6 = inlined_call_operand.vmem [shape: f32[2], index: 6, kind: input, shape index: {}]
  %s7 = inlined_call_operand.vmem [shape: f32[2], index: 7, kind: input, shape index: {}]
  %s8 = inlined_call_operand.hbm [shape: f32[2,32,256], index: 8, kind: output, shape index: {}]
  %s9 = sld [smem:[#allocation0]]
  $region77: #{tpu_custom_call.1} parent=0
    _
  %s11 = ssub.s32 1, %s9
  %s12 = scalar_select 0, %s11, %s9
  $region1: #{tpu_custom_call.1} parent=0
    #allocation2 [shape = 'u8[32768]{0}', space=vmem, size = 0x8000, scoped, tag = 'input window, operand 4, single buffered']
    #allocation3 [shape = 's32[2]{0}', space=sflag, size = 0x8, scoped, tag = 'scoped memory for tpu_custom_call.1']
    #allocation4 [shape = 's32[2]{0}', space=sflag, size = 0x8, scoped, tag = 'scoped memory for tpu_custom_call.1']
    #allocation5 [shape = 's32[2]{0}', space=sflag, size = 0x8, scoped, tag = 'scoped memory for tpu_custom_call.1']
    #allocation6 [shape = 'u8[512]{0}', space=smem, size = 0x200, scoped, tag = 'input window, operand 6, single buffered']
    #allocation7 [shape = 'u8[512]{0}', space=smem, size = 0x200, scoped, tag = 'input window, operand 7, single buffered']
    #allocation8 [shape = 's32[1]{0}', space=sflag, size = 0x4, scoped, tag = 'scoped memory for tpu_custom_call.1']
    #allocation9 [shape = 'u8[32768]{0}', space=vmem, size = 0x8000, scoped, tag = 'output window, operand 0']
    %13 = vsyncpa [#allocation3], 0
    %14 = vsyncpa [#allocation5], 0
    %15 = vsyncpa [#allocation8], 0
    %16 = vsyncpa [#allocation4], 0
    %s17 = scalar_lea.sflag [#allocation4], 1
    %18 = vsyncpa %s17, 0
    loop: start=0, step=1, limit=6
    $region2: #{tpu_custom_call.1} parent=1 // loop_pre_header
      _
    $region3: #{tpu_custom_call.1} parent=1 // loop_header
      %s20 = sphi 0, %s24
      %p21 = scmp.ge.s32.totalorder %s20, 6
      %s27 = sphi 0, %s39
      %s28 = sphi 0, %s35
      %s29 = sphi 0, %s27
      %s30 = sphi 0, %s28
      %s31 = sphi 0, %s29
      %s32 = sphi 0, %s30
      %s42 = sphi 0, %s44
      %s45 = sphi 0, %s42
      %s46 = sphi 0, %s45
      %s62 = sphi 0, %s46
      %s68 = sphi 0, %s70
      %s71 = sphi 0, %s68
      %s72 = sphi 0, %s71
      %s88 = sphi 0, %s72
      %s92 = sphi 0, %s92
      %s94 = sphi 0, %s92
      %s95 = sphi 0, %s94
      %s109 = sphi 0, %s95
      %s113 = sphi 0, %s113
      %s115 = sphi 0, %s113
      %s116 = sphi 0, %s115
      %s130 = sphi 0, %s116
      %s134 = sphi 0, %s134
      %s136 = sphi 0, %s134
      %s137 = sphi 0, %s136
      %s151 = sphi 0, %s137
      %s155 = sphi 0, %s155
      %s157 = sphi 0, %s155
      %s158 = sphi 0, %s157
      %s172 = sphi 0, %s158
      %s176 = sphi 0, %s176
      %s178 = sphi 0, %s176
      %s179 = sphi 0, %s178
      %s193 = sphi 0, %s179
      %s197 = sphi 0, %s197
      %s199 = sphi 0, %s197
      %s200 = sphi 0, %s199
      %s214 = sphi 0, %s200
      %s222 = sphi 0, %s224
      %s225 = sphi 0, %s222
      %s226 = sphi 0, %s225
      %s242 = sphi 0, %s226
    $region4: #{tpu_custom_call.1} parent=1 // loop_header_branch
      %23 = sbr.rel (%p21) target = $region8
    $region5: #{tpu_custom_call.1} parent=1 // loop_body
      %s25 = ssub.s32 %s20, 1
      %s26 = ssub.s32 %s20, 2
      %s33 = sadd.s32 1, %s28
      %p34 = scmp.ge.s32.totalorder %s33, 2
      %s35 = scalar_select %p34, 0, %s33
      %s36 = sadd.s32 1, %s27
      %s37 = scalar_select %p34, %s36, %s27
      %p38 = scmp.ge.s32.totalorder %s37, 2
      %s39 = scalar_select %p38, 0, %s37
      %s40 = ssub.s32 %s27, %s39
      %p41 = scmp.eq.s32.totalorder %s40, 0
      %s43 = sadd.s32 %s42, 1
      %s44 = scalar_select %p41, %s42, %s43
      %p47 = pneg %p41
      %p48 = scmp.eq.s32.totalorder %s20, 3
      %p49 = por %p47, %p48
      %p50 = scmp.ne.s32.totalorder %s42, %s45
      %p51 = scmp.eq.s32.totalorder %s20, 0
      %p52 = por %p50, %p51
      %p53 = scmp.ne.s32.totalorder %s42, %s45
      %p54 = scmp.eq.s32.totalorder %s25, 3
      %p55 = por %p53, %p54
      %p56 = scmp.ne.s32.totalorder %s45, %s46
      %p57 = scmp.eq.s32.totalorder %s25, 0
      %p58 = por %p56, %p57
      %p59 = scmp.ne.s32.totalorder %s45, %s46
      %p60 = scmp.eq.s32.totalorder %s26, 3
      %p61 = por %p59, %p60
      %p63 = scmp.ne.s32.totalorder %s46, %s62
      %p64 = scmp.eq.s32.totalorder %s26, 0
      %p65 = por %p63, %p64
      %s66 = ssub.s32 %s27, %s39
      %p67 = scmp.eq.s32.totalorder %s66, 0
      %s69 = sadd.s32 %s68, 1
      %s70 = scalar_select %p67, %s68, %s69
      %p73 = pneg %p67
      %p74 = scmp.eq.s32.totalorder %s20, 3
      %p75 = por %p73, %p74
      %p76 = scmp.ne.s32.totalorder %s68, %s71
      %p77 = scmp.eq.s32.totalorder %s20, 0
      %p78 = por %p76, %p77
      %p79 = scmp.ne.s32.totalorder %s68, %s71
      %p80 = scmp.eq.s32.totalorder %s25, 3
      %p81 = por %p79, %p80
      %p82 = scmp.ne.s32.totalorder %s71, %s72
      %p83 = scmp.eq.s32.totalorder %s25, 0
      %p84 = por %p82, %p83
      %p85 = scmp.ne.s32.totalorder %s71, %s72
      %p86 = scmp.eq.s32.totalorder %s26, 3
      %p87 = por %p85, %p86
      %p89 = scmp.ne.s32.totalorder %s72, %s88
      %p90 = scmp.eq.s32.totalorder %s26, 0
      %p91 = por %p89, %p90
      %s93 = sadd.s32 %s92, 1
      %p96 = scmp.eq.s32.totalorder %s20, 3
      %p97 = scmp.ne.s32.totalorder %s92, %s94
      %p98 = scmp.eq.s32.totalorder %s20, 0
      %p99 = por %p97, %p98
      %p100 = scmp.ne.s32.totalorder %s92, %s94
      %p101 = scmp.eq.s32.totalorder %s25, 3
      %p102 = por %p100, %p101
      %p103 = scmp.ne.s32.totalorder %s94, %s95
      %p104 = scmp.eq.s32.totalorder %s25, 0
      %p105 = por %p103, %p104
      %p106 = scmp.ne.s32.totalorder %s94, %s95
      %p107 = scmp.eq.s32.totalorder %s26, 3
      %p108 = por %p106, %p107
      %p110 = scmp.ne.s32.totalorder %s95, %s109
      %p111 = scmp.eq.s32.totalorder %s26, 0
      %p112 = por %p110, %p111
      %s114 = sadd.s32 %s113, 1
      %p117 = scmp.eq.s32.totalorder %s20, 3
      %p118 = scmp.ne.s32.totalorder %s113, %s115
      %p119 = scmp.eq.s32.totalorder %s20, 0
      %p120 = por %p118, %p119
      %p121 = scmp.ne.s32.totalorder %s113, %s115
      %p122 = scmp.eq.s32.totalorder %s25, 3
      %p123 = por %p121, %p122
      %p124 = scmp.ne.s32.totalorder %s115, %s116
      %p125 = scmp.eq.s32.totalorder %s25, 0
      %p126 = por %p124, %p125
      %p127 = scmp.ne.s32.totalorder %s115, %s116
      %p128 = scmp.eq.s32.totalorder %s26, 3
      %p129 = por %p127, %p128
      %p131 = scmp.ne.s32.totalorder %s116, %s130
      %p132 = scmp.eq.s32.totalorder %s26, 0
      %p133 = por %p131, %p132
      %s135 = sadd.s32 %s134, 1
      %p138 = scmp.eq.s32.totalorder %s20, 3
      %p139 = scmp.ne.s32.totalorder %s134, %s136
      %p140 = scmp.eq.s32.totalorder %s20, 0
      %p141 = por %p139, %p140
      %p142 = scmp.ne.s32.totalorder %s134, %s136
      %p143 = scmp.eq.s32.totalorder %s25, 3
      %p144 = por %p142, %p143
      %p145 = scmp.ne.s32.totalorder %s136, %s137
      %p146 = scmp.eq.s32.totalorder %s25, 0
      %p147 = por %p145, %p146
      %p148 = scmp.ne.s32.totalorder %s136, %s137
      %p149 = scmp.eq.s32.totalorder %s26, 3
      %p150 = por %p148, %p149
      %p152 = scmp.ne.s32.totalorder %s137, %s151
      %p153 = scmp.eq.s32.totalorder %s26, 0
      %p154 = por %p152, %p153
      %s156 = sadd.s32 %s155, 1
      %p159 = scmp.eq.s32.totalorder %s20, 3
      %p160 = scmp.ne.s32.totalorder %s155, %s157
      %p161 = scmp.eq.s32.totalorder %s20, 0
      %p162 = por %p160, %p161
      %p163 = scmp.ne.s32.totalorder %s155, %s157
      %p164 = scmp.eq.s32.totalorder %s25, 3
      %p165 = por %p163, %p164
      %p166 = scmp.ne.s32.totalorder %s157, %s158
      %p167 = scmp.eq.s32.totalorder %s25, 0
      %p168 = por %p166, %p167
      %p169 = scmp.ne.s32.totalorder %s157, %s158
      %p170 = scmp.eq.s32.totalorder %s26, 3
      %p171 = por %p169, %p170
      %p173 = scmp.ne.s32.totalorder %s158, %s172
      %p174 = scmp.eq.s32.totalorder %s26, 0
      %p175 = por %p173, %p174
      %s177 = sadd.s32 %s176, 1
      %p180 = scmp.eq.s32.totalorder %s20, 3
      %p181 = scmp.ne.s32.totalorder %s176, %s178
      %p182 = scmp.eq.s32.totalorder %s20, 0
      %p183 = por %p181, %p182
      %p184 = scmp.ne.s32.totalorder %s176, %s178
      %p185 = scmp.eq.s32.totalorder %s25, 3
      %p186 = por %p184, %p185
      %p187 = scmp.ne.s32.totalorder %s178, %s179
      %p188 = scmp.eq.s32.totalorder %s25, 0
      %p189 = por %p187, %p188
      %p190 = scmp.ne.s32.totalorder %s178, %s179
      %p191 = scmp.eq.s32.totalorder %s26, 3
      %p192 = por %p190, %p191
      %p194 = scmp.ne.s32.totalorder %s179, %s193
      %p195 = scmp.eq.s32.totalorder %s26, 0
      %p196 = por %p194, %p195
      %s198 = sadd.s32 %s197, 1
      %p201 = scmp.eq.s32.totalorder %s20, 3
      %p202 = scmp.ne.s32.totalorder %s197, %s199
      %p203 = scmp.eq.s32.totalorder %s20, 0
      %p204 = por %p202, %p203
      %p205 = scmp.ne.s32.totalorder %s197, %s199
      %p206 = scmp.eq.s32.totalorder %s25, 3
      %p207 = por %p205, %p206
      %p208 = scmp.ne.s32.totalorder %s199, %s200
      %p209 = scmp.eq.s32.totalorder %s25, 0
      %p210 = por %p208, %p209
      %p211 = scmp.ne.s32.totalorder %s199, %s200
      %p212 = scmp.eq.s32.totalorder %s26, 3
      %p213 = por %p211, %p212
      %p215 = scmp.ne.s32.totalorder %s200, %s214
      %p216 = scmp.eq.s32.totalorder %s26, 0
      %p217 = por %p215, %p216
      %s218 = ssub.s32 %s27, %s39
      %s219 = ssub.s32 %s28, %s35
      %s220 = sor.u32 %s218, %s219
      %p221 = scmp.eq.s32.totalorder %s220, 0
      %s223 = sadd.s32 %s222, 1
      %s224 = scalar_select %p221, %s222, %s223
      %p227 = pneg %p221
      %p228 = scmp.eq.s32.totalorder %s20, 3
      %p229 = por %p227, %p228
      %p230 = scmp.ne.s32.totalorder %s222, %s225
      %p231 = scmp.eq.s32.totalorder %s20, 0
      %p232 = por %p230, %p231
      %p233 = scmp.ne.s32.totalorder %s222, %s225
      %p234 = scmp.eq.s32.totalorder %s25, 3
      %p235 = por %p233, %p234
      %p236 = scmp.ne.s32.totalorder %s225, %s226
      %p237 = scmp.eq.s32.totalorder %s25, 0
      %p238 = por %p236, %p237
      %p239 = scmp.ne.s32.totalorder %s225, %s226
      %p240 = scmp.eq.s32.totalorder %s26, 3
      %p241 = por %p239, %p240
      %p243 = scmp.ne.s32.totalorder %s226, %s242
      %p244 = scmp.eq.s32.totalorder %s26, 0
      %p245 = por %p243, %p244
      %p246 = scmp.le.s32.totalorder 1, %s20
      %p247 = scmp.lt.s32.totalorder %s20, 5
      %p248 = pnand %p246, %p247
      %p249 = pneg %p248
      // Predicated region
      $region9: #{tpu_custom_call.1} parent=5 // pred_check
        _
      $region10: #{tpu_custom_call.1} parent=5 // pred_check_branch
        %251 = sbr.rel (%p248) target = $region12
      $region11: #{tpu_custom_call.1} parent=5 // pred_region
        %s252 = ssub.s32 %s20, 1
        // Predicated region
        $region13: #{tpu_custom_call.1} parent=11 // pred_check
          %p253 = pneg %p105
        $region14: #{tpu_custom_call.1} parent=11 // pred_check_branch
          %255 = sbr.rel (%p253) target = $region16
        $region15: #{tpu_custom_call.1} parent=11 // pred_region
          _
        $region16: #{tpu_custom_call.1} parent=11 // pred_fallthru
          _
        // Predicated region
        $region17: #{tpu_custom_call.1} parent=11 // pred_check
          %p256 = pneg %p126
        $region18: #{tpu_custom_call.1} parent=11 // pred_check_branch
          %258 = sbr.rel (%p256) target = $region20
        $region19: #{tpu_custom_call.1} parent=11 // pred_region
          _
        $region20: #{tpu_custom_call.1} parent=11 // pred_fallthru
          _
        // Predicated region
        $region21: #{tpu_custom_call.1} parent=11 // pred_check
          %p259 = pneg %p147
        $region22: #{tpu_custom_call.1} parent=11 // pred_check_branch
          %261 = sbr.rel (%p259) target = $region24
        $region23: #{tpu_custom_call.1} parent=11 // pred_region
          %263 = vsyncadd [#allocation3], 0
          %s264 = sshll.u32 %s4, 4
          %s265 = int_to_ptr.hbm [resolvable:$true] %s264
          %s266 = sshll.u32 [#allocation2], 4
          %s267 = int_to_ptr.vmem [resolvable:$true] %s266
          %272 = dma.hbm_to_vmem [thread:$0]  %s265, 1024, %s267, [#allocation3], 256, 256, 16
        $region24: #{tpu_custom_call.1} parent=11 // pred_fallthru
          _
        // Predicated region
        $region25: #{tpu_custom_call.1} parent=11 // pred_check
          %p273 = pneg %p168
        $region26: #{tpu_custom_call.1} parent=11 // pred_check_branch
          %275 = sbr.rel (%p273) target = $region28
        $region27: #{tpu_custom_call.1} parent=11 // pred_region
          _
        $region28: #{tpu_custom_call.1} parent=11 // pred_fallthru
          _
        // Predicated region
        $region29: #{tpu_custom_call.1} parent=11 // pred_check
          %p276 = pneg %p189
        $region30: #{tpu_custom_call.1} parent=11 // pred_check_branch
          %278 = sbr.rel (%p276) target = $region32
        $region31: #{tpu_custom_call.1} parent=11 // pred_region
          %280 = vsyncadd [#allocation5], 0
          %s282 = sshll.u32 %s6, 4
          %s283 = int_to_ptr.vmem [resolvable:$true] %s282
          %285 = dma.vmem_to_smem %s283, 16, [#allocation6], [#allocation5]
        $region32: #{tpu_custom_call.1} parent=11 // pred_fallthru
          _
        // Predicated region
        $region33: #{tpu_custom_call.1} parent=11 // pred_check
          %p286 = pneg %p210
        $region34: #{tpu_custom_call.1} parent=11 // pred_check_branch
          %288 = sbr.rel (%p286) target = $region36
        $region35: #{tpu_custom_call.1} parent=11 // pred_region
          %290 = vsyncadd [#allocation8], 0
          %s292 = sshll.u32 %s7, 4
          %s293 = int_to_ptr.vmem [resolvable:$true] %s292
          %295 = dma.vmem_to_smem %s293, 16, [#allocation7], [#allocation8]
        $region36: #{tpu_custom_call.1} parent=11 // pred_fallthru
          _
      $region12: #{tpu_custom_call.1} parent=5 // pred_fallthru
        _
      %p296 = scmp.lt.s32.totalorder %s20, 4
      // Predicated region
      $region37: #{tpu_custom_call.1} parent=5 // pred_check
        %p297 = pneg %p296
      $region38: #{tpu_custom_call.1} parent=5 // pred_check_branch
        %299 = sbr.rel (%p297) target = $region40
      $region39: #{tpu_custom_call.1} parent=5 // pred_region
        // Predicated region
        $region41: #{tpu_custom_call.1} parent=39 // pred_check
          %p300 = pneg %p52
        $region42: #{tpu_custom_call.1} parent=39 // pred_check_branch
          %302 = sbr.rel (%p300) target = $region44
        $region43: #{tpu_custom_call.1} parent=39 // pred_region
          %p303 = scmp.lt.s32.totalorder %s27, 1
          %s304 = scalar_select %p303, %s27, 1
          %s305 = smul.addr %s304, 8
          %s306 = scalar_lea.vmem %s0, %s305
        $region44: #{tpu_custom_call.1} parent=39 // pred_fallthru
          _
        // Predicated region
        $region45: #{tpu_custom_call.1} parent=39 // pred_check
          %p307 = pneg %p78
        $region46: #{tpu_custom_call.1} parent=39 // pred_check_branch
          %309 = sbr.rel (%p307) target = $region48
        $region47: #{tpu_custom_call.1} parent=39 // pred_region
          %p310 = scmp.lt.s32.totalorder %s27, 1
          %s311 = scalar_select %p310, %s27, 1
          %s312 = smul.addr %s311, 6
          %s313 = smul.addr %s312, 8
          %s314 = scalar_lea.vmem %s1, %s313
        $region48: #{tpu_custom_call.1} parent=39 // pred_fallthru
          _
      $region40: #{tpu_custom_call.1} parent=5 // pred_fallthru
        _
      %p315 = scmp.le.s32.totalorder 1, %s20
      %p316 = scmp.lt.s32.totalorder %s20, 5
      %p317 = pnand %p315, %p316
      %p318 = pneg %p317
      // Predicated region
      $region49: #{tpu_custom_call.1} parent=5 // pred_check
        _
      $region50: #{tpu_custom_call.1} parent=5 // pred_check_branch
        %320 = sbr.rel (%p317) target = $region52
      $region51: #{tpu_custom_call.1} parent=5 // pred_region
        %s321 = ssub.s32 %s20, 1
        // Predicated region
        $region53: #{tpu_custom_call.1} parent=51 // pred_check
          %p322 = pneg %p147
        $region54: #{tpu_custom_call.1} parent=51 // pred_check_branch
          %324 = sbr.rel (%p322) target = $region56
        $region55: #{tpu_custom_call.1} parent=51 // pred_region
          %326 = dma.done [#allocation3], 1024
        $region56: #{tpu_custom_call.1} parent=51 // pred_fallthru
          _
        // Predicated region
        $region57: #{tpu_custom_call.1} parent=51 // pred_check
          %p327 = pneg %p189
        $region58: #{tpu_custom_call.1} parent=51 // pred_check_branch
          %329 = sbr.rel (%p327) target = $region60
        $region59: #{tpu_custom_call.1} parent=51 // pred_region
          %331 = dma.done [#allocation5], 16
        $region60: #{tpu_custom_call.1} parent=51 // pred_fallthru
          _
        // Predicated region
        $region61: #{tpu_custom_call.1} parent=51 // pred_check
          %p332 = pneg %p210
        $region62: #{tpu_custom_call.1} parent=51 // pred_check_branch
          %334 = sbr.rel (%p332) target = $region64
        $region63: #{tpu_custom_call.1} parent=51 // pred_region
          %336 = dma.done [#allocation8], 16
        $region64: #{tpu_custom_call.1} parent=51 // pred_fallthru
          _
        %337 = sfence
        %p338 = scmp.lt.s32.totalorder %s29, 1
        %s339 = scalar_select %p338, %s29, 1
        %s340 = smul.addr %s339, 8
        %s341 = scalar_lea.vmem %s0, %s340
        %p342 = pneg %p58
        %p343 = pneg %p55
        %p344 = scmp.lt.s32.totalorder %s29, 1
        %s345 = scalar_select %p344, %s29, 1
        %s346 = smul.addr %s345, 6
        %s347 = smul.addr %s346, 8
        %s348 = scalar_lea.vmem %s1, %s347
        %p349 = pneg %p84
        %p350 = pneg %p81
        %p351 = pneg %p105
        %p352 = pneg %p102
        %p353 = pneg %p126
        %p354 = pneg %p123
        %p355 = pneg %p147
        %p356 = pneg %p144
        %p357 = pneg %p168
        %p358 = pneg %p165
        %p359 = pneg %p189
        %p360 = pneg %p186
        %p361 = pneg %p210
        %p362 = pneg %p207
        %p363 = pneg %p238
        %p364 = pneg %p235
        %s365 = sand.u32 %s225, 1
        %s366 = scalar_lea.sflag [#allocation4], %s365
        %s367 = sand.u32 %s225, 1
        %s368 = smul.addr %s367, 32
        %s369 = scalar_lea.vmem [#allocation9], %s368
        %p370 = scmp.lt.s32.totalorder %s29, 1
        %s371 = scalar_select %p370, %s29, 1
        %s372 = smul.addr %s371, 8
        %s373 = scalar_lea.vmem %s0, %s372
        %p374 = scmp.lt.s32.totalorder %s29, 1
        %s375 = scalar_select %p374, %s29, 1
        %s376 = smul.addr %s375, 6
        %s377 = smul.addr %s376, 8
        %s378 = scalar_lea.vmem %s1, %s377
        %s379 = smul.u32 %s30, 128
        %s380 = sshra.s32 %s379, 7
        %s381 = sand.u32 %s379, 127
        %s382 = smul.addr %s380, 8
        %s383 = scalar_lea.vmem %s378, %s382
        %v384 = vld [vmem:[%s383] sm:$0xff]
        %v385 = vld [vmem:[%s383 + $0x8] sm:$0xff]
        %v386 = vld [vmem:[%s383 + $0x18] sm:$0xff]
        %v387 = vld [vmem:[%s383 + $0x20] sm:$0xff]
        %v388 = vlaneseq
        %v389 = vand.u32 %v388, 127
        %vm390 = vcmp.lt.s32.totalorder %v389, 0
        %v391 = vsub.s32 0, %v389
        %v392 = vsel %vm390, %v391, %v389
        %v393 = vshrl.u32 %v392, 4
        %v394 = vand.u32 %v392, 15
        %v395 = vsub.s32 0, %v394
        %v396 = vsel %vm390, %v395, %v394
        %vm397 = vcmp.ne.s32.totalorder %v396, 0
        %vm398 = vcmp.lt.s32.totalorder %v396, 0
        %vm399 = vmand %vm398, %vm397
        %v400 = vadd.s32 %v396, 16
        %v401 = vsel %vm399, %v400, %v396
        %vm402 = vcmp.ne.s32.totalorder %v401, 0
        %vm403 = vcmp.ne.s32.totalorder %v401, 15
        %v404 = vld [vmem:[%s2] sm:$0xff]
        %v405 = vld [vmem:[%s2 + $0x8] sm:$0xff]
        %v406 = vld [vmem:[%s2 + $0x10] sm:$0xff]
        %v407 = vld [vmem:[%s2 + $0x18] sm:$0xff]
        %v408 = vld [vmem:[%s3] sm:$0xff]
        %v409 = vld [vmem:[%s3 + $0x8] sm:$0xff]
        %v410 = vld [vmem:[%s3 + $0x10] sm:$0xff]
        %v411 = vld [vmem:[%s3 + $0x18] sm:$0xff]
        %413 = vset.pattern.permute.xlu0 0
        %414 = vperm.xlu0 %413, %v408
        %v415 = vpop.permute.xlu0 %414
        %418 = vset.pattern.permute.xlu0 0
        %419 = vperm.xlu0 %418, %v409
        %v420 = vpop.permute.xlu0 %419
        %423 = vset.pattern.permute.xlu0 0
        %424 = vperm.xlu0 %423, %v410
        %v425 = vpop.permute.xlu0 %424
        %428 = vset.pattern.permute.xlu0 0
        %429 = vperm.xlu0 %428, %v411
        %v430 = vpop.permute.xlu0 %429
        %436 = vrot.lane.b32.xlu0 %v384, 112
        %v437 = vpop.permute.xlu0 %436
        %438 = vrot.lane.b32.xlu0 %v385, 112
        %v439 = vpop.permute.xlu0 %438
        %440 = vrot.lane.b32.xlu0 %v386, 112
        %v441 = vpop.permute.xlu0 %440
        %442 = vrot.lane.b32.xlu0 %v387, 112
        %v443 = vpop.permute.xlu0 %442
        %vm444 = vcmask 916480
        %v445 = vsel %vm444, %v437, %v439
        %v446 = vsel %vm444, %v441, %v443
        %vm449 = vcmask 130048
        %v451 = vsel %vm449, %v404, 0
        %v454 = vsel %vm449, %v405, 0
        %v457 = vsel %vm449, %v406, 0
        %v460 = vsel %vm449, %v407, 0
        %462 = vmatpush.msra.mxu0 0.0
        %463 = vmatpush.msra.mxu0 0.0
        %464 = vmatpush.msra.mxu0 0.0
        %465 = vmatpush.msra.mxu0 0.0
        %466 = vmatpush.msra.mxu0 0.0
        %467 = vmatpush.msra.mxu0 0.0
        %468 = vmatpush.msra.mxu0 0.0
        %469 = vmatpush.msra.mxu0 0.0
        %470 = vmatpush.msra.mxu0 0.0
        %471 = vmatpush.msra.mxu0 0.0
        %472 = vmatpush.msra.mxu0 0.0
        %473 = vmatpush.msra.mxu0 0.0
        %474 = vmatpush.msra.mxu0 0.0
        %475 = vmatpush.msra.mxu0 0.0
        %476 = vmatpush.msra.mxu0 %v446
        %477 = vmatpush.msra.mxu0 %v445
        %478 = vmatmul.f32.gmra.mxu0 %v451
        %v479 = vpop.f32.mrf.mxu0
        %v480 = vadd.f32 %v415, %v479
        %481 = vmatmul.f32.gmra.mxu0 %v454
        %v482 = vpop.f32.mrf.mxu0
        %v483 = vadd.f32 %v420, %v482
        %484 = vmatmul.f32.gmra.mxu0 %v457
        %v485 = vpop.f32.mrf.mxu0
        %v486 = vadd.f32 %v425, %v485
        %487 = vmatmul.f32.gmra.mxu0 %v460
        %v488 = vpop.f32.mrf.mxu0
        %v489 = vadd.f32 %v430, %v488
        %490 = vdwg.mxu0
        %v491 = vld [vmem:[%s373] sm:$0xff]
        %v493 = vsel %vm449, %v491, 0
        %495 = vmatpush.msra.mxu0 0.0
        %496 = vmatpush.msra.mxu0 0.0
        %497 = vmatpush.msra.mxu0 0.0
        %498 = vmatpush.msra.mxu0 0.0
        %499 = vmatpush.msra.mxu0 0.0
        %500 = vmatpush.msra.mxu0 0.0
        %501 = vmatpush.msra.mxu0 0.0
        %502 = vmatpush.msra.mxu0 0.0
        %503 = vmatpush.msra.mxu0 0.0
        %504 = vmatpush.msra.mxu0 0.0
        %505 = vmatpush.msra.mxu0 0.0
        %506 = vmatpush.msra.mxu0 0.0
        %507 = vmatpush.msra.mxu0 0.0
        %508 = vmatpush.msra.mxu0 0.0
        %509 = vmatpush.msra.mxu0 %v483
        %510 = vmatpush.msra.mxu0 %v480
        %511 = vmatmul.f32.gmra.mxu0 %v493
        %v512 = vpop.f32.mrf.mxu0
        %v513 = vadd.f32 0.0, %v512
        %514 = vdwg.mxu0
        %v515 = vrot.slane %v513, 4
        %v516 = vmax.f32 %v513, %v515
        %v517 = vrot.slane %v516, 2
        %v518 = vmax.f32 %v516, %v517
        %v519 = vrot.slane %v518, 1
        %v520 = vmax.f32 %v518, %v519
        %v521 = vmul.f32 %v520, 0.25
        %s522 = sld [smem:[#allocation6]]
        %v523 = vstv %s522
        %v524 = vadd.f32 %v521, %v523
        %v525 = vxor.u32 %v524, 2147483648
        %v526 = vmul.f32 %v525, 1.442695
        %v527 = vpow.pop %v526
        %v528 = vadd.f32 %v527, 1.0
        %v529 = vrcp.pop %v528
        %v530 = vmul.f32 %v528, %v529
        %v531 = vsub.f32 1.0, %v530
        %v532 = vmul.f32 %v529, %v531
        %v533 = vadd.f32 %v529, %v532
        %vm534 = vweird.f32 %v528
        %vm535 = vweird.f32 %v529
        %vm536 = vmor %vm534, %vm535
        %v537 = vsel %vm536, %v529, %v533
        %v538 = vand.u32 2147483647, %v528
        %vm539 = vcmp.eq.f32.partialorder %v538, 8.507059e+37
        %v540 = vand.u32 %v528, 2147483648
        %v541 = vor.u32 1.1754944e-38, %v540
        %v542 = vsel %vm539, %v541, %v537
        %v543 = vmul.f32 1.0, %v542
        %s544 = sld [smem:[#allocation7]]
        %v545 = vstv %s544
        %v546 = vmul.f32 %v543, %v545
        %547 = vrot.lane.b32.xlu0 %v491, 112
        %v548 = vpop.permute.xlu0 %547
        %v549 = vsel %vm449, %v548, 0
        %551 = vmatpush.msra.mxu0 0.0
        %552 = vmatpush.msra.mxu0 0.0
        %553 = vmatpush.msra.mxu0 0.0
        %554 = vmatpush.msra.mxu0 0.0
        %555 = vmatpush.msra.mxu0 0.0
        %556 = vmatpush.msra.mxu0 0.0
        %557 = vmatpush.msra.mxu0 0.0
        %558 = vmatpush.msra.mxu0 0.0
        %559 = vmatpush.msra.mxu0 0.0
        %560 = vmatpush.msra.mxu0 0.0
        %561 = vmatpush.msra.mxu0 0.0
        %562 = vmatpush.msra.mxu0 0.0
        %563 = vmatpush.msra.mxu0 0.0
        %564 = vmatpush.msra.mxu0 0.0
        %565 = vmatpush.msra.mxu0 %v489
        %566 = vmatpush.msra.mxu0 %v486
        %567 = vmatmul.f32.gmra.mxu0 %v549
        %v568 = vpop.f32.mrf.mxu0
        %v569 = vadd.f32 0.0, %v568
        %570 = vdwg.mxu0
        %v571 = vrot.slane %v569, 4
        %v572 = vmax.f32 %v569, %v571
        %v573 = vrot.slane %v572, 2
        %v574 = vmax.f32 %v572, %v573
        %v575 = vrot.slane %v574, 1
        %v576 = vmax.f32 %v574, %v575
        %v577 = vmul.f32 %v576, 0.25
        %s578 = sld [smem:[#allocation6 + $0x1]]
        %v579 = vstv %s578
        %v580 = vadd.f32 %v577, %v579
        %v581 = vxor.u32 %v580, 2147483648
        %v582 = vmul.f32 %v581, 1.442695
        %v583 = vpow.pop %v582
        %v584 = vadd.f32 %v583, 1.0
        %v585 = vrcp.pop %v584
        %v586 = vmul.f32 %v584, %v585
        %v587 = vsub.f32 1.0, %v586
        %v588 = vmul.f32 %v585, %v587
        %v589 = vadd.f32 %v585, %v588
        %vm590 = vweird.f32 %v584
        %vm591 = vweird.f32 %v585
        %vm592 = vmor %vm590, %vm591
        %v593 = vsel %vm592, %v585, %v589
        %v594 = vand.u32 2147483647, %v584
        %vm595 = vcmp.eq.f32.partialorder %v594, 8.507059e+37
        %v596 = vand.u32 %v584, 2147483648
        %v597 = vor.u32 1.1754944e-38, %v596
        %v598 = vsel %vm595, %v597, %v593
        %v599 = vmul.f32 1.0, %v598
        %s600 = sld [smem:[#allocation7 + $0x1]]
        %v601 = vstv %s600
        %v602 = vmul.f32 %v599, %v601
        %vm603 = vcmask 1040384
        %v604 = vsel %vm603, %v546, %v602
        %v606 = vrot.slane %v604, 1
        %v607 = vperm.slane %v604, 0
        %v608 = vperm.slane %v606, 0
        %611 = vrot.lane.b32.xlu0 %v384, 1
        %v612 = vpop.permute.xlu0 %611
        %613 = vrot.lane.b32.xlu0 %v386, 1
        %v614 = vpop.permute.xlu0 %613
        %v615 = vsel %vm402, 1, 0
        %vm616 = vcmp.eq.s32.totalorder %v615, 1
        %v617 = vsel %vm616, %v612, 0.0
        %v618 = vsel %vm616, %v614, 0.0
        %619 = vrot.lane.b32.xlu0 %v384, 127
        %v620 = vpop.permute.xlu0 %619
        %621 = vrot.lane.b32.xlu0 %v386, 127
        %v622 = vpop.permute.xlu0 %621
        %v623 = vsel %vm403, 1, 0
        %vm624 = vcmp.eq.s32.totalorder %v623, 1
        %v625 = vsel %vm624, %v620, 0.0
        %v626 = vsel %vm624, %v622, 0.0
        %v627 = vld [vmem:[#allocation2] sm:$0xff]
        %v628 = vld [vmem:[#allocation2 + $0x10] sm:$0xff]
        %v629 = vld [vmem:[#allocation2 + $0x20] sm:$0xff]
        %v630 = vld [vmem:[#allocation2 + $0x30] sm:$0xff]
        %631 = vrot.lane.b32.xlu0 %v445, 1
        %v632 = vpop.permute.xlu0 %631
        %633 = vrot.lane.b32.xlu0 %v446, 1
        %v634 = vpop.permute.xlu0 %633
        %v635 = vsel %vm616, %v632, 0.0
        %v636 = vsel %vm616, %v634, 0.0
        %637 = vrot.lane.b32.xlu0 %v445, 127
        %v638 = vpop.permute.xlu0 %637
        %639 = vrot.lane.b32.xlu0 %v446, 127
        %v640 = vpop.permute.xlu0 %639
        %v641 = vsel %vm624, %v638, 0.0
        %v642 = vsel %vm624, %v640, 0.0
        %647 = vrot.lane.b32.xlu0 %v627, 80
        %v648 = vpop.permute.xlu0 %647
        %649 = vrot.lane.b32.xlu0 %v628, 80
        %v650 = vpop.permute.xlu0 %649
        %651 = vrot.lane.b32.xlu0 %v629, 80
        %v652 = vpop.permute.xlu0 %651
        %653 = vrot.lane.b32.xlu0 %v630, 80
        %v654 = vpop.permute.xlu0 %653
        %vm655 = vcmask 392192
        %v656 = vsel %vm655, %v648, 0
        %v658 = vsel %vm655, %v650, 0
        %v660 = vsel %vm655, %v652, 0
        %v662 = vsel %vm655, %v654, 0
        %664 = vmatpush.msra.mxu0 0.0
        %665 = vmatpush.msra.mxu0 0.0
        %666 = vmatpush.msra.mxu0 0.0
        %667 = vmatpush.msra.mxu0 0.0
        %668 = vmatpush.msra.mxu0 0.0
        %669 = vmatpush.msra.mxu0 0.0
        %670 = vmatpush.msra.mxu0 0.0
        %671 = vmatpush.msra.mxu0 0.0
        %672 = vmatpush.msra.mxu0 0.0
        %673 = vmatpush.msra.mxu0 0.0
        %674 = vmatpush.msra.mxu0 %v642
        %675 = vmatpush.msra.mxu0 %v641
        %676 = vmatpush.msra.mxu0 %v446
        %677 = vmatpush.msra.mxu0 %v445
        %678 = vmatpush.msra.mxu0 %v636
        %679 = vmatpush.msra.mxu0 %v635
        %680 = vmatmul.f32.gmra.mxu0 %v656
        %v681 = vpop.f32.mrf.mxu0
        %v682 = vadd.f32 0.0, %v681
        %683 = vmatmul.f32.gmra.mxu0 %v658
        %v684 = vpop.f32.mrf.mxu0
        %v685 = vadd.f32 0.0, %v684
        %686 = vmatmul.f32.gmra.mxu0 %v660
        %v687 = vpop.f32.mrf.mxu0
        %v688 = vadd.f32 0.0, %v687
        %689 = vmatmul.f32.gmra.mxu0 %v662
        %v690 = vpop.f32.mrf.mxu0
        %v691 = vadd.f32 0.0, %v690
        %692 = vdwg.mxu0
        %v693 = vsel %vm655, %v627, 0
        %v695 = vsel %vm655, %v628, 0
        %v697 = vsel %vm655, %v629, 0
        %v699 = vsel %vm655, %v630, 0
        %701 = vmatpush.msra.mxu0 0.0
        %702 = vmatpush.msra.mxu0 0.0
        %703 = vmatpush.msra.mxu0 0.0
        %704 = vmatpush.msra.mxu0 0.0
        %705 = vmatpush.msra.mxu0 0.0
        %706 = vmatpush.msra.mxu0 0.0
        %707 = vmatpush.msra.mxu0 0.0
        %708 = vmatpush.msra.mxu0 0.0
        %709 = vmatpush.msra.mxu0 0.0
        %710 = vmatpush.msra.mxu0 0.0
        %711 = vmatpush.msra.mxu0 %v626
        %712 = vmatpush.msra.mxu0 %v625
        %713 = vmatpush.msra.mxu0 %v386
        %714 = vmatpush.msra.mxu0 %v384
        %715 = vmatpush.msra.mxu0 %v618
        %716 = vmatpush.msra.mxu0 %v617
        %717 = vmatmul.f32.gmra.mxu0 %v693
        %v718 = vpop.f32.mrf.mxu0
        %v719 = vadd.f32 %v682, %v718
        %720 = vmatmul.f32.gmra.mxu0 %v695
        %v721 = vpop.f32.mrf.mxu0
        %v722 = vadd.f32 %v685, %v721
        %723 = vmatmul.f32.gmra.mxu0 %v697
        %v724 = vpop.f32.mrf.mxu0
        %v725 = vadd.f32 %v688, %v724
        %726 = vmatmul.f32.gmra.mxu0 %v699
        %v727 = vpop.f32.mrf.mxu0
        %v728 = vadd.f32 %v691, %v727
        %729 = vdwg.mxu0
        %730 = vrot.lane.b32.xlu0 %v384, 96
        %v731 = vpop.permute.xlu0 %730
        %732 = vrot.lane.b32.xlu0 %v385, 96
        %v733 = vpop.permute.xlu0 %732
        %734 = vrot.lane.b32.xlu0 %v386, 96
        %v735 = vpop.permute.xlu0 %734
        %736 = vrot.lane.b32.xlu0 %v387, 96
        %v737 = vpop.permute.xlu0 %736
        %vm738 = vcmask 785408
        %v739 = vsel %vm738, %v731, %v733
        %v740 = vsel %vm738, %v735, %v737
        %743 = vrot.lane.b32.xlu0 %v739, 1
        %v744 = vpop.permute.xlu0 %743
        %745 = vrot.lane.b32.xlu0 %v740, 1
        %v746 = vpop.permute.xlu0 %745
        %v747 = vsel %vm616, %v744, 0.0
        %v748 = vsel %vm616, %v746, 0.0
        %749 = vrot.lane.b32.xlu0 %v739, 127
        %v750 = vpop.permute.xlu0 %749
        %751 = vrot.lane.b32.xlu0 %v740, 127
        %v752 = vpop.permute.xlu0 %751
        %v753 = vsel %vm624, %v750, 0.0
        %v754 = vsel %vm624, %v752, 0.0
        %v755 = vld [vmem:[#allocation2] sm:$0xff]
        %v756 = vld [vmem:[#allocation2 + $0x8] sm:$0xff]
        %v757 = vld [vmem:[#allocation2 + $0x10] sm:$0xff]
        %v758 = vld [vmem:[#allocation2 + $0x18] sm:$0xff]
        %v759 = vld [vmem:[#allocation2 + $0x20] sm:$0xff]
        %v760 = vld [vmem:[#allocation2 + $0x28] sm:$0xff]
        %v761 = vld [vmem:[#allocation2 + $0x30] sm:$0xff]
        %v762 = vld [vmem:[#allocation2 + $0x38] sm:$0xff]
        %771 = vrot.lane.b32.xlu0 %v755, 32
        %v772 = vpop.permute.xlu0 %771
        %773 = vrot.lane.b32.xlu0 %v756, 32
        %v774 = vpop.permute.xlu0 %773
        %775 = vrot.lane.b32.xlu0 %v757, 32
        %v776 = vpop.permute.xlu0 %775
        %777 = vrot.lane.b32.xlu0 %v758, 32
        %v778 = vpop.permute.xlu0 %777
        %779 = vrot.lane.b32.xlu0 %v759, 32
        %v780 = vpop.permute.xlu0 %779
        %781 = vrot.lane.b32.xlu0 %v760, 32
        %v782 = vpop.permute.xlu0 %781
        %783 = vrot.lane.b32.xlu0 %v761, 32
        %v784 = vpop.permute.xlu0 %783
        %785 = vrot.lane.b32.xlu0 %v762, 32
        %v786 = vpop.permute.xlu0 %785
        %vm787 = vcmask 261120
        %v788 = vsel %vm787, %v772, %v774
        %v789 = vsel %vm787, %v776, %v778
        %v790 = vsel %vm787, %v780, %v782
        %v791 = vsel %vm787, %v784, %v786
        %v792 = vsel %vm655, %v788, 0
        %v794 = vsel %vm655, %v789, 0
        %v796 = vsel %vm655, %v790, 0
        %v798 = vsel %vm655, %v791, 0
        %800 = vmatpush.msra.mxu0 0.0
        %801 = vmatpush.msra.mxu0 0.0
        %802 = vmatpush.msra.mxu0 0.0
        %803 = vmatpush.msra.mxu0 0.0
        %804 = vmatpush.msra.mxu0 0.0
        %805 = vmatpush.msra.mxu0 0.0
        %806 = vmatpush.msra.mxu0 0.0
        %807 = vmatpush.msra.mxu0 0.0
        %808 = vmatpush.msra.mxu0 0.0
        %809 = vmatpush.msra.mxu0 0.0
        %810 = vmatpush.msra.mxu0 %v754
        %811 = vmatpush.msra.mxu0 %v753
        %812 = vmatpush.msra.mxu0 %v740
        %813 = vmatpush.msra.mxu0 %v739
        %814 = vmatpush.msra.mxu0 %v748
        %815 = vmatpush.msra.mxu0 %v747
        %816 = vmatmul.f32.gmra.mxu0 %v792
        %v817 = vpop.f32.mrf.mxu0
        %v818 = vadd.f32 0.0, %v817
        %819 = vmatmul.f32.gmra.mxu0 %v794
        %v820 = vpop.f32.mrf.mxu0
        %v821 = vadd.f32 0.0, %v820
        %822 = vmatmul.f32.gmra.mxu0 %v796
        %v823 = vpop.f32.mrf.mxu0
        %v824 = vadd.f32 0.0, %v823
        %825 = vmatmul.f32.gmra.mxu0 %v798
        %v826 = vpop.f32.mrf.mxu0
        %v827 = vadd.f32 0.0, %v826
        %828 = vdwg.mxu0
        %v829 = vadd.f32 %v719, %v818
        %v830 = vadd.f32 %v722, %v821
        %v831 = vadd.f32 %v725, %v824
        %v832 = vadd.f32 %v728, %v827
        %v833 = vld [vmem:[%s5] sm:$0xff]
        %v834 = vld [vmem:[%s5 + $0x8] sm:$0xff]
        %v835 = vld [vmem:[%s5 + $0x10] sm:$0xff]
        %v836 = vld [vmem:[%s5 + $0x18] sm:$0xff]
        %838 = vset.pattern.permute.xlu0 0
        %839 = vperm.xlu0 %838, %v833
        %v840 = vpop.permute.xlu0 %839
        %843 = vset.pattern.permute.xlu0 0
        %844 = vperm.xlu0 %843, %v834
        %v845 = vpop.permute.xlu0 %844
        %848 = vset.pattern.permute.xlu0 0
        %849 = vperm.xlu0 %848, %v835
        %v850 = vpop.permute.xlu0 %849
        %853 = vset.pattern.permute.xlu0 0
        %854 = vperm.xlu0 %853, %v836
        %v855 = vpop.permute.xlu0 %854
        %v857 = vadd.f32 %v829, %v840
        %v858 = vadd.f32 %v830, %v845
        %v859 = vadd.f32 %v831, %v850
        %v860 = vadd.f32 %v832, %v855
        %v861 = vmul.f32 %v857, %v607
        %v862 = vmul.f32 %v858, %v607
        %v863 = vmul.f32 %v859, %v608
        %v864 = vmul.f32 %v860, %v608
        %865 = vst [vmem:[%s369] sm:$0xff] %v861
        %866 = vst [vmem:[%s369 + $0x8] sm:$0xff] %v862
        %867 = vst [vmem:[%s369 + $0x10] sm:$0xff] %v863
        %868 = vst [vmem:[%s369 + $0x18] sm:$0xff] %v864
        %s869 = sand.u32 %s225, 1
        %s870 = scalar_lea.sflag [#allocation4], %s869
        %s871 = sand.u32 %s225, 1
        %s872 = smul.addr %s871, 32
        %s873 = scalar_lea.vmem [#allocation9], %s872
        // Predicated region
        $region65: #{tpu_custom_call.1} parent=51 // pred_check
          %p874 = pneg %p235
        $region66: #{tpu_custom_call.1} parent=51 // pred_check_branch
          %876 = sbr.rel (%p874) target = $region68
        $region67: #{tpu_custom_call.1} parent=51 // pred_region
          %878 = vsyncadd %s870, 0
          %s879 = smul.addr %s29, 8
          %s880 = sadd.s32 %s30, %s879
          %s881 = smul.addr %s880, 8
          %s882 = scalar_lea.hbm %s8, %s881
          %s883 = sshll.u32 %s873, 4
          %s884 = int_to_ptr.vmem [resolvable:$true] %s883
          %s885 = sshll.u32 %s882, 4
          %s886 = int_to_ptr.hbm [resolvable:$true] %s885
          %891 = dma.vmem_to_hbm [thread:$0]  %s884, 512, %s886, %s870, 128, 256, 8
        $region68: #{tpu_custom_call.1} parent=51 // pred_fallthru
          _
      $region52: #{tpu_custom_call.1} parent=5 // pred_fallthru
        _
      %p892 = scmp.le.s32.totalorder 2, %s20
      // Predicated region
      $region69: #{tpu_custom_call.1} parent=5 // pred_check
        %p893 = pneg %p892
      $region70: #{tpu_custom_call.1} parent=5 // pred_check_branch
        %895 = sbr.rel (%p893) target = $region72
      $region71: #{tpu_custom_call.1} parent=5 // pred_region
        %s896 = ssub.s32 %s20, 2
        // Predicated region
        $region73: #{tpu_custom_call.1} parent=71 // pred_check
          %p897 = pneg %p241
        $region74: #{tpu_custom_call.1} parent=71 // pred_check_branch
          %899 = sbr.rel (%p897) target = $region76
        $region75: #{tpu_custom_call.1} parent=71 // pred_region
          %s900 = sand.u32 %s226, 1
          %s901 = scalar_lea.sflag [#allocation4], %s900
          %s902 = sand.u32 %s226, 1
          %s903 = smul.addr %s902, 32
          %s904 = scalar_lea.vmem [#allocation9], %s903
          %906 = dma.done %s901, 512
        $region76: #{tpu_custom_call.1} parent=71 // pred_fallthru
          _
      $region72: #{tpu_custom_call.1} parent=5 // pred_fallthru
        _
    $region6: #{tpu_custom_call.1} parent=1 // loop_footer
      %s24 = sadd.s32 1, %s20
    $region7: #{tpu_custom_call.1} parent=1 // loop_footer_branch
      %19 = sbr.rel target = $region3
    $region8: #{tpu_custom_call.1} parent=1 // loop_exit
      _
    %907 = vsyncpa [#allocation3], 1
    %s908 = scalar_lea.sflag [#allocation3], 1
    %909 = vsyncpa %s908, 1
    %910 = vsyncpa [#allocation4], 1
    %s911 = scalar_lea.sflag [#allocation4], 1
    %912 = vsyncpa %s911, 1
    %913 = vsyncpa [#allocation5], 1
    %s914 = scalar_lea.sflag [#allocation5], 1
    %915 = vsyncpa %s914, 1
    %916 = vsyncpa [#allocation8], 1

</llo_original>
